<compile_context>
chip_gen: v5e
topology: v5e:2x2
jax: 0.10.0
libtpu: 0.0.40
codegen_flags: <defaults>
</compile_context>

<pallas_src>
import jax
import jax.numpy as jnp
from jax.experimental import pallas as pl
from jax.experimental.pallas import tpu as pltpu


DIM = 32
NUM_LAYERS = 5
BN_EPS = 1e-5
GIN_EPS = 0.0


# ----------------------------------------------------------------------------
# Fused Pallas kernel: 5 GIN blocks + pooling + head, single grid point.
# ----------------------------------------------------------------------------
def gin_fused_kernel(a_ref, p_ref, x_ref, w1_ref, w2_ref, vec_ref,
                     fc1w_ref, fc1b_ref, fc2w_ref, fc2b_ref, o_ref):
    a = a_ref[...]                      # bf16 (N, N); already contains (1+eps)*I
    x = x_ref[...]                      # f32  (N, DIM) activation, stays on-chip

    for l in range(NUM_LAYERS):         # unrolled; static indices into stacked refs
        # GIN aggregation: A_hat @ x  ==  (1+eps)*x + sum_{j in N(i)} x_j
        agg = jnp.dot(a, x.astype(jnp.bfloat16),
                      preferred_element_type=jnp.float32)
        # nn = Linear -> ReLU -> Linear
        h = jnp.dot(agg.astype(jnp.bfloat16), w1_ref[l],
                    preferred_element_type=jnp.float32) \
            + vec_ref[4 * l + 0:4 * l + 1, :]
        h = jnp.maximum(h, 0.0)
        h = jnp.dot(h.astype(jnp.bfloat16), w2_ref[l],
                    preferred_element_type=jnp.float32) \
            + vec_ref[4 * l + 1:4 * l + 2, :]
        # F.relu(conv(x))
        h = jnp.maximum(h, 0.0)
        # eval-mode BatchNorm1d folded into a per-channel scale/shift
        x = h * vec_ref[4 * l + 2:4 * l + 3, :] + vec_ref[4 * l + 3:4 * l + 4, :]

    # global_add_pool
    pooled = jnp.dot(p_ref[...], x.astype(jnp.bfloat16),
                     preferred_element_type=jnp.float32)
    # fc1 -> ReLU -> (dropout = identity in eval) -> fc2 -> log_softmax
    h = jnp.dot(pooled.astype(jnp.bfloat16), fc1w_ref[...],
                preferred_element_type=jnp.float32) + fc1b_ref[...]
    h = jnp.maximum(h, 0.0)
    # TODO(synk): dropout(p=0.5) only matters in training mode; identity here.
    logits = jnp.dot(h.astype(jnp.bfloat16), fc2w_ref[...],
                     preferred_element_type=jnp.float32) + fc2b_ref[...]
    m = jnp.max(logits, axis=-1, keepdims=True)
    z = logits - m
    lse = jnp.log(jnp.sum(jnp.exp(z), axis=-1, keepdims=True))
    o_ref[...] = z - lse


_VMEM = pl.BlockSpec(memory_space=pltpu.MemorySpace.VMEM)


@jax.jit
def gin_forward(a_hat, p, x, w1s, w2s, vecs, fc1w, fc1b, fc2w, fc2b):
    g = p.shape[0]
    c = fc2w.shape[1]
    return pl.pallas_call(
        gin_fused_kernel,
        out_shape=jax.ShapeDtypeStruct((g, c), jnp.float32),
        in_specs=[_VMEM] * 10,
        out_specs=_VMEM,
    )(a_hat, p, x, w1s, w2s, vecs, fc1w, fc1b, fc2w, fc2b)


# ----------------------------------------------------------------------------
# Parameter construction (deterministic, synthetic) + host-side folding/packing
# ----------------------------------------------------------------------------
def make_linear(key, fan_in, fan_out):
    """PyTorch-style uniform(-1/sqrt(fan_in), 1/sqrt(fan_in)); weights (in, out)."""
    kw, kb = jax.random.split(key)
    bound = 1.0 / jnp.sqrt(jnp.float32(fan_in))
    w = jax.random.uniform(kw, (fan_in, fan_out), jnp.float32, -bound, bound)
    b = jax.random.uniform(kb, (fan_out,), jnp.float32, -bound, bound)
    return w, b


def make_params(key, num_features, num_classes):
    assert num_features <= DIM, "feature-pad scheme assumes num_features <= DIM"
    keys = jax.random.split(key, NUM_LAYERS + 2)
    w1_list, w2_list, vec_rows = [], [], []
    in_dim = num_features
    for layer in range(NUM_LAYERS):
        k1, k2, kbn = jax.random.split(keys[layer], 3)
        w1, b1 = make_linear(k1, in_dim, DIM)
        w2, b2 = make_linear(k2, DIM, DIM)
        gamma = 1.0 + 0.05 * jax.random.normal(kbn, (DIM,), jnp.float32)
        beta = 0.05 * jax.random.normal(jax.random.fold_in(kbn, 1), (DIM,), jnp.float32)
        mean = jnp.zeros((DIM,), jnp.float32)     # BN running_mean (eval mode)
        var = jnp.ones((DIM,), jnp.float32)       # BN running_var  (eval mode)
        # Fold eval-mode BN into a single per-channel scale/shift (after ReLU).
        scale = gamma * jax.lax.rsqrt(var + BN_EPS)
        shift = beta - mean * scale
        if w1.shape[0] < DIM:                     # zero-pad layer-0 fan-in to DIM
            w1 = jnp.pad(w1, ((0, DIM - w1.shape[0]), (0, 0)))
        w1_list.append(w1)
        w2_list.append(w2)
        vec_rows.extend([b1, b2, scale, shift])
        in_dim = DIM
    w1s = jnp.stack(w1_list).astype(jnp.bfloat16)      # (5, DIM, DIM)
    w2s = jnp.stack(w2_list).astype(jnp.bfloat16)      # (5, DIM, DIM)
    vecs = jnp.stack(vec_rows).astype(jnp.float32)     # (20, DIM): b1,b2,scale,shift per layer
    fc1w, fc1b = make_linear(keys[NUM_LAYERS], DIM, DIM)
    fc2w, fc2b = make_linear(keys[NUM_LAYERS + 1], DIM, num_classes)
    return (w1s, w2s, vecs,
            fc1w.astype(jnp.bfloat16), fc1b.reshape(1, DIM).astype(jnp.float32),
            fc2w.astype(jnp.bfloat16), fc2b.reshape(1, num_classes).astype(jnp.float32))


if __name__ == "__main__":
    key = jax.random.PRNGKey(0)
    k_x, k_e = jax.random.split(key, 2)

    num_nodes = 24
    num_features = 16
    num_classes = 4
    num_graphs = 2
    num_edges = 64

    # Node features (zero-pad feature dim up to DIM; matching w1 rows are zero)
    x = jax.random.normal(k_x, (num_nodes, num_features), jnp.float32)
    x_pad = jnp.pad(x, ((0, 0), (0, DIM - num_features)))

    # Random edge_index (src, dst) -> dense aggregation matrix A[dst, src] += 1
    edge_index = jax.random.randint(k_e, (2, num_edges), 0, num_nodes)
    a = jnp.zeros((num_nodes, num_nodes), jnp.float32).at[
        edge_index[1], edge_index[0]].add(1.0)
    # A_hat = A + (1 + eps) * I  (GIN self term folded into the matmul)
    a_hat = (a + (1.0 + GIN_EPS) * jnp.eye(num_nodes, dtype=jnp.float32)
             ).astype(jnp.bfloat16)

    # Graph assignment: first half -> graph 0, second half -> graph 1
    batch = jnp.concatenate([
        jnp.zeros((num_nodes // 2,), jnp.int32),
        jnp.ones((num_nodes - num_nodes // 2,), jnp.int32),
    ])
    p = (jnp.arange(num_graphs)[:, None] == batch[None, :]).astype(jnp.bfloat16)

    w1s, w2s, vecs, fc1w, fc1b, fc2w, fc2b = make_params(
        jax.random.PRNGKey(42), num_features, num_classes)

    out = gin_forward(a_hat, p, x_pad, w1s, w2s, vecs, fc1w, fc1b, fc2w, fc2b)
    out = jax.block_until_ready(out)

    assert out.shape == (num_graphs, num_classes)
    # log_softmax rows should sum (in prob space) to ~1
    assert jnp.allclose(jnp.sum(jnp.exp(out), axis=-1), 1.0, atol=1e-4)
    print("KERNEL_OK")
</pallas_src>

<mosaic_0001>
module attributes {stable_mosaic.version = 11 : i64} {
  func.func @gin_fused_kernel(%arg0: memref<24x24xbf16, #tpu.memory_space<vmem>>, %arg1: memref<2x24xbf16, #tpu.memory_space<vmem>>, %arg2: memref<24x32xf32, #tpu.memory_space<vmem>>, %arg3: memref<5x32x32xbf16, #tpu.memory_space<vmem>>, %arg4: memref<5x32x32xbf16, #tpu.memory_space<vmem>>, %arg5: memref<20x32xf32, #tpu.memory_space<vmem>>, %arg6: memref<32x32xbf16, #tpu.memory_space<vmem>>, %arg7: memref<1x32xf32, #tpu.memory_space<vmem>>, %arg8: memref<32x4xbf16, #tpu.memory_space<vmem>>, %arg9: memref<1x4xf32, #tpu.memory_space<vmem>>, %arg10: memref<2x4xf32, #tpu.memory_space<vmem>>) attributes {dimension_semantics = [], scalar_prefetch = 0 : i64, scratch_operands = 0 : i64, tpu.core_type = #tpu.core_type<tc>} {
    %c0 = arith.constant 0 : index
    %c0_0 = arith.constant 0 : index
    %0 = vector.load %arg0[%c0, %c0_0] : memref<24x24xbf16, #tpu.memory_space<vmem>>, vector<24x24xbf16>
    %c0_1 = arith.constant 0 : index
    %c0_2 = arith.constant 0 : index
    %1 = vector.load %arg2[%c0_1, %c0_2] : memref<24x32xf32, #tpu.memory_space<vmem>>, vector<24x32xf32>
    %2 = arith.truncf %1 : vector<24x32xf32> to vector<24x32xbf16>
    %cst = arith.constant dense<0.000000e+00> : vector<24x32xf32>
    %3 = tpu.matmul %0, %2, %cst {dimension_numbers = #tpu.dot_dimension_numbers<[1], [0], [0], [1], [0, 0, 1, 1], [], []>} : vector<24x24xbf16>, vector<24x32xbf16>, vector<24x32xf32> -> vector<24x32xf32>
    %4 = arith.truncf %3 : vector<24x32xf32> to vector<24x32xbf16>
    %c0_3 = arith.constant 0 : index
    %c0_4 = arith.constant 0 : index
    %c0_5 = arith.constant 0 : index
    %5 = vector.load %arg3[%c0_3, %c0_4, %c0_5] : memref<5x32x32xbf16, #tpu.memory_space<vmem>>, vector<1x32x32xbf16>
    %6 = vector.shape_cast %5 : vector<1x32x32xbf16> to vector<32x32xbf16>
    %cst_6 = arith.constant dense<0.000000e+00> : vector<24x32xf32>
    %7 = tpu.matmul %4, %6, %cst_6 {dimension_numbers = #tpu.dot_dimension_numbers<[1], [0], [0], [1], [0, 0, 1, 1], [], []>} : vector<24x32xbf16>, vector<32x32xbf16>, vector<24x32xf32> -> vector<24x32xf32>
    %c0_7 = arith.constant 0 : index
    %c0_8 = arith.constant 0 : index
    %8 = vector.load %arg5[%c0_7, %c0_8] : memref<20x32xf32, #tpu.memory_space<vmem>>, vector<1x32xf32>
    %9 = vector.broadcast %8 : vector<1x32xf32> to vector<24x32xf32>
    %10 = arith.addf %7, %9 : vector<24x32xf32>
    %cst_9 = arith.constant 0.000000e+00 : f32
    %11 = vector.broadcast %cst_9 : f32 to vector<24x32xf32>
    %12 = arith.maximumf %10, %11 : vector<24x32xf32>
    %13 = arith.truncf %12 : vector<24x32xf32> to vector<24x32xbf16>
    %c0_10 = arith.constant 0 : index
    %c0_11 = arith.constant 0 : index
    %c0_12 = arith.constant 0 : index
    %14 = vector.load %arg4[%c0_10, %c0_11, %c0_12] : memref<5x32x32xbf16, #tpu.memory_space<vmem>>, vector<1x32x32xbf16>
    %15 = vector.shape_cast %14 : vector<1x32x32xbf16> to vector<32x32xbf16>
    %cst_13 = arith.constant dense<0.000000e+00> : vector<24x32xf32>
    %16 = tpu.matmul %13, %15, %cst_13 {dimension_numbers = #tpu.dot_dimension_numbers<[1], [0], [0], [1], [0, 0, 1, 1], [], []>} : vector<24x32xbf16>, vector<32x32xbf16>, vector<24x32xf32> -> vector<24x32xf32>
    %c1 = arith.constant 1 : index
    %c0_14 = arith.constant 0 : index
    %17 = vector.load %arg5[%c1, %c0_14] : memref<20x32xf32, #tpu.memory_space<vmem>>, vector<1x32xf32>
    %18 = vector.broadcast %17 : vector<1x32xf32> to vector<24x32xf32>
    %19 = arith.addf %16, %18 : vector<24x32xf32>
    %cst_15 = arith.constant 0.000000e+00 : f32
    %20 = vector.broadcast %cst_15 : f32 to vector<24x32xf32>
    %21 = arith.maximumf %19, %20 : vector<24x32xf32>
    %c2 = arith.constant 2 : index
    %c0_16 = arith.constant 0 : index
    %22 = vector.load %arg5[%c2, %c0_16] : memref<20x32xf32, #tpu.memory_space<vmem>>, vector<1x32xf32>
    %23 = vector.broadcast %22 : vector<1x32xf32> to vector<24x32xf32>
    %24 = arith.mulf %21, %23 : vector<24x32xf32>
    %c3 = arith.constant 3 : index
    %c0_17 = arith.constant 0 : index
    %25 = vector.load %arg5[%c3, %c0_17] : memref<20x32xf32, #tpu.memory_space<vmem>>, vector<1x32xf32>
    %26 = vector.broadcast %25 : vector<1x32xf32> to vector<24x32xf32>
    %27 = arith.addf %24, %26 : vector<24x32xf32>
    %28 = arith.truncf %27 : vector<24x32xf32> to vector<24x32xbf16>
    %cst_18 = arith.constant dense<0.000000e+00> : vector<24x32xf32>
    %29 = tpu.matmul %0, %28, %cst_18 {dimension_numbers = #tpu.dot_dimension_numbers<[1], [0], [0], [1], [0, 0, 1, 1], [], []>} : vector<24x24xbf16>, vector<24x32xbf16>, vector<24x32xf32> -> vector<24x32xf32>
    %30 = arith.truncf %29 : vector<24x32xf32> to vector<24x32xbf16>
    %c1_19 = arith.constant 1 : index
    %c0_20 = arith.constant 0 : index
    %c0_21 = arith.constant 0 : index
    %31 = vector.load %arg3[%c1_19, %c0_20, %c0_21] : memref<5x32x32xbf16, #tpu.memory_space<vmem>>, vector<1x32x32xbf16>
    %32 = vector.shape_cast %31 : vector<1x32x32xbf16> to vector<32x32xbf16>
    %cst_22 = arith.constant dense<0.000000e+00> : vector<24x32xf32>
    %33 = tpu.matmul %30, %32, %cst_22 {dimension_numbers = #tpu.dot_dimension_numbers<[1], [0], [0], [1], [0, 0, 1, 1], [], []>} : vector<24x32xbf16>, vector<32x32xbf16>, vector<24x32xf32> -> vector<24x32xf32>
    %c4 = arith.constant 4 : index
    %c0_23 = arith.constant 0 : index
    %34 = vector.load %arg5[%c4, %c0_23] : memref<20x32xf32, #tpu.memory_space<vmem>>, vector<1x32xf32>
    %35 = vector.broadcast %34 : vector<1x32xf32> to vector<24x32xf32>
    %36 = arith.addf %33, %35 : vector<24x32xf32>
    %cst_24 = arith.constant 0.000000e+00 : f32
    %37 = vector.broadcast %cst_24 : f32 to vector<24x32xf32>
    %38 = arith.maximumf %36, %37 : vector<24x32xf32>
    %39 = arith.truncf %38 : vector<24x32xf32> to vector<24x32xbf16>
    %c1_25 = arith.constant 1 : index
    %c0_26 = arith.constant 0 : index
    %c0_27 = arith.constant 0 : index
    %40 = vector.load %arg4[%c1_25, %c0_26, %c0_27] : memref<5x32x32xbf16, #tpu.memory_space<vmem>>, vector<1x32x32xbf16>
    %41 = vector.shape_cast %40 : vector<1x32x32xbf16> to vector<32x32xbf16>
    %cst_28 = arith.constant dense<0.000000e+00> : vector<24x32xf32>
    %42 = tpu.matmul %39, %41, %cst_28 {dimension_numbers = #tpu.dot_dimension_numbers<[1], [0], [0], [1], [0, 0, 1, 1], [], []>} : vector<24x32xbf16>, vector<32x32xbf16>, vector<24x32xf32> -> vector<24x32xf32>
    %c5 = arith.constant 5 : index
    %c0_29 = arith.constant 0 : index
    %43 = vector.load %arg5[%c5, %c0_29] : memref<20x32xf32, #tpu.memory_space<vmem>>, vector<1x32xf32>
    %44 = vector.broadcast %43 : vector<1x32xf32> to vector<24x32xf32>
    %45 = arith.addf %42, %44 : vector<24x32xf32>
    %cst_30 = arith.constant 0.000000e+00 : f32
    %46 = vector.broadcast %cst_30 : f32 to vector<24x32xf32>
    %47 = arith.maximumf %45, %46 : vector<24x32xf32>
    %c6 = arith.constant 6 : index
    %c0_31 = arith.constant 0 : index
    %48 = vector.load %arg5[%c6, %c0_31] : memref<20x32xf32, #tpu.memory_space<vmem>>, vector<1x32xf32>
    %49 = vector.broadcast %48 : vector<1x32xf32> to vector<24x32xf32>
    %50 = arith.mulf %47, %49 : vector<24x32xf32>
    %c7 = arith.constant 7 : index
    %c0_32 = arith.constant 0 : index
    %51 = vector.load %arg5[%c7, %c0_32] : memref<20x32xf32, #tpu.memory_space<vmem>>, vector<1x32xf32>
    %52 = vector.broadcast %51 : vector<1x32xf32> to vector<24x32xf32>
    %53 = arith.addf %50, %52 : vector<24x32xf32>
    %54 = arith.truncf %53 : vector<24x32xf32> to vector<24x32xbf16>
    %cst_33 = arith.constant dense<0.000000e+00> : vector<24x32xf32>
    %55 = tpu.matmul %0, %54, %cst_33 {dimension_numbers = #tpu.dot_dimension_numbers<[1], [0], [0], [1], [0, 0, 1, 1], [], []>} : vector<24x24xbf16>, vector<24x32xbf16>, vector<24x32xf32> -> vector<24x32xf32>
    %56 = arith.truncf %55 : vector<24x32xf32> to vector<24x32xbf16>
    %c2_34 = arith.constant 2 : index
    %c0_35 = arith.constant 0 : index
    %c0_36 = arith.constant 0 : index
    %57 = vector.load %arg3[%c2_34, %c0_35, %c0_36] : memref<5x32x32xbf16, #tpu.memory_space<vmem>>, vector<1x32x32xbf16>
    %58 = vector.shape_cast %57 : vector<1x32x32xbf16> to vector<32x32xbf16>
    %cst_37 = arith.constant dense<0.000000e+00> : vector<24x32xf32>
    %59 = tpu.matmul %56, %58, %cst_37 {dimension_numbers = #tpu.dot_dimension_numbers<[1], [0], [0], [1], [0, 0, 1, 1], [], []>} : vector<24x32xbf16>, vector<32x32xbf16>, vector<24x32xf32> -> vector<24x32xf32>
    %c8 = arith.constant 8 : index
    %c0_38 = arith.constant 0 : index
    %60 = vector.load %arg5[%c8, %c0_38] : memref<20x32xf32, #tpu.memory_space<vmem>>, vector<1x32xf32>
    %61 = vector.broadcast %60 : vector<1x32xf32> to vector<24x32xf32>
    %62 = arith.addf %59, %61 : vector<24x32xf32>
    %cst_39 = arith.constant 0.000000e+00 : f32
    %63 = vector.broadcast %cst_39 : f32 to vector<24x32xf32>
    %64 = arith.maximumf %62, %63 : vector<24x32xf32>
    %65 = arith.truncf %64 : vector<24x32xf32> to vector<24x32xbf16>
    %c2_40 = arith.constant 2 : index
    %c0_41 = arith.constant 0 : index
    %c0_42 = arith.constant 0 : index
    %66 = vector.load %arg4[%c2_40, %c0_41, %c0_42] : memref<5x32x32xbf16, #tpu.memory_space<vmem>>, vector<1x32x32xbf16>
    %67 = vector.shape_cast %66 : vector<1x32x32xbf16> to vector<32x32xbf16>
    %cst_43 = arith.constant dense<0.000000e+00> : vector<24x32xf32>
    %68 = tpu.matmul %65, %67, %cst_43 {dimension_numbers = #tpu.dot_dimension_numbers<[1], [0], [0], [1], [0, 0, 1, 1], [], []>} : vector<24x32xbf16>, vector<32x32xbf16>, vector<24x32xf32> -> vector<24x32xf32>
    %c9 = arith.constant 9 : index
    %c0_44 = arith.constant 0 : index
    %69 = vector.load %arg5[%c9, %c0_44] : memref<20x32xf32, #tpu.memory_space<vmem>>, vector<1x32xf32>
    %70 = vector.broadcast %69 : vector<1x32xf32> to vector<24x32xf32>
    %71 = arith.addf %68, %70 : vector<24x32xf32>
    %cst_45 = arith.constant 0.000000e+00 : f32
    %72 = vector.broadcast %cst_45 : f32 to vector<24x32xf32>
    %73 = arith.maximumf %71, %72 : vector<24x32xf32>
    %c10 = arith.constant 10 : index
    %c0_46 = arith.constant 0 : index
    %74 = vector.load %arg5[%c10, %c0_46] : memref<20x32xf32, #tpu.memory_space<vmem>>, vector<1x32xf32>
    %75 = vector.broadcast %74 : vector<1x32xf32> to vector<24x32xf32>
    %76 = arith.mulf %73, %75 : vector<24x32xf32>
    %c11 = arith.constant 11 : index
    %c0_47 = arith.constant 0 : index
    %77 = vector.load %arg5[%c11, %c0_47] : memref<20x32xf32, #tpu.memory_space<vmem>>, vector<1x32xf32>
    %78 = vector.broadcast %77 : vector<1x32xf32> to vector<24x32xf32>
    %79 = arith.addf %76, %78 : vector<24x32xf32>
    %80 = arith.truncf %79 : vector<24x32xf32> to vector<24x32xbf16>
    %cst_48 = arith.constant dense<0.000000e+00> : vector<24x32xf32>
    %81 = tpu.matmul %0, %80, %cst_48 {dimension_numbers = #tpu.dot_dimension_numbers<[1], [0], [0], [1], [0, 0, 1, 1], [], []>} : vector<24x24xbf16>, vector<24x32xbf16>, vector<24x32xf32> -> vector<24x32xf32>
    %82 = arith.truncf %81 : vector<24x32xf32> to vector<24x32xbf16>
    %c3_49 = arith.constant 3 : index
    %c0_50 = arith.constant 0 : index
    %c0_51 = arith.constant 0 : index
    %83 = vector.load %arg3[%c3_49, %c0_50, %c0_51] : memref<5x32x32xbf16, #tpu.memory_space<vmem>>, vector<1x32x32xbf16>
    %84 = vector.shape_cast %83 : vector<1x32x32xbf16> to vector<32x32xbf16>
    %cst_52 = arith.constant dense<0.000000e+00> : vector<24x32xf32>
    %85 = tpu.matmul %82, %84, %cst_52 {dimension_numbers = #tpu.dot_dimension_numbers<[1], [0], [0], [1], [0, 0, 1, 1], [], []>} : vector<24x32xbf16>, vector<32x32xbf16>, vector<24x32xf32> -> vector<24x32xf32>
    %c12 = arith.constant 12 : index
    %c0_53 = arith.constant 0 : index
    %86 = vector.load %arg5[%c12, %c0_53] : memref<20x32xf32, #tpu.memory_space<vmem>>, vector<1x32xf32>
    %87 = vector.broadcast %86 : vector<1x32xf32> to vector<24x32xf32>
    %88 = arith.addf %85, %87 : vector<24x32xf32>
    %cst_54 = arith.constant 0.000000e+00 : f32
    %89 = vector.broadcast %cst_54 : f32 to vector<24x32xf32>
    %90 = arith.maximumf %88, %89 : vector<24x32xf32>
    %91 = arith.truncf %90 : vector<24x32xf32> to vector<24x32xbf16>
    %c3_55 = arith.constant 3 : index
    %c0_56 = arith.constant 0 : index
    %c0_57 = arith.constant 0 : index
    %92 = vector.load %arg4[%c3_55, %c0_56, %c0_57] : memref<5x32x32xbf16, #tpu.memory_space<vmem>>, vector<1x32x32xbf16>
    %93 = vector.shape_cast %92 : vector<1x32x32xbf16> to vector<32x32xbf16>
    %cst_58 = arith.constant dense<0.000000e+00> : vector<24x32xf32>
    %94 = tpu.matmul %91, %93, %cst_58 {dimension_numbers = #tpu.dot_dimension_numbers<[1], [0], [0], [1], [0, 0, 1, 1], [], []>} : vector<24x32xbf16>, vector<32x32xbf16>, vector<24x32xf32> -> vector<24x32xf32>
    %c13 = arith.constant 13 : index
    %c0_59 = arith.constant 0 : index
    %95 = vector.load %arg5[%c13, %c0_59] : memref<20x32xf32, #tpu.memory_space<vmem>>, vector<1x32xf32>
    %96 = vector.broadcast %95 : vector<1x32xf32> to vector<24x32xf32>
    %97 = arith.addf %94, %96 : vector<24x32xf32>
    %cst_60 = arith.constant 0.000000e+00 : f32
    %98 = vector.broadcast %cst_60 : f32 to vector<24x32xf32>
    %99 = arith.maximumf %97, %98 : vector<24x32xf32>
    %c14 = arith.constant 14 : index
    %c0_61 = arith.constant 0 : index
    %100 = vector.load %arg5[%c14, %c0_61] : memref<20x32xf32, #tpu.memory_space<vmem>>, vector<1x32xf32>
    %101 = vector.broadcast %100 : vector<1x32xf32> to vector<24x32xf32>
    %102 = arith.mulf %99, %101 : vector<24x32xf32>
    %c15 = arith.constant 15 : index
    %c0_62 = arith.constant 0 : index
    %103 = vector.load %arg5[%c15, %c0_62] : memref<20x32xf32, #tpu.memory_space<vmem>>, vector<1x32xf32>
    %104 = vector.broadcast %103 : vector<1x32xf32> to vector<24x32xf32>
    %105 = arith.addf %102, %104 : vector<24x32xf32>
    %106 = arith.truncf %105 : vector<24x32xf32> to vector<24x32xbf16>
    %cst_63 = arith.constant dense<0.000000e+00> : vector<24x32xf32>
    %107 = tpu.matmul %0, %106, %cst_63 {dimension_numbers = #tpu.dot_dimension_numbers<[1], [0], [0], [1], [0, 0, 1, 1], [], []>} : vector<24x24xbf16>, vector<24x32xbf16>, vector<24x32xf32> -> vector<24x32xf32>
    %108 = arith.truncf %107 : vector<24x32xf32> to vector<24x32xbf16>
    %c4_64 = arith.constant 4 : index
    %c0_65 = arith.constant 0 : index
    %c0_66 = arith.constant 0 : index
    %109 = vector.load %arg3[%c4_64, %c0_65, %c0_66] : memref<5x32x32xbf16, #tpu.memory_space<vmem>>, vector<1x32x32xbf16>
    %110 = vector.shape_cast %109 : vector<1x32x32xbf16> to vector<32x32xbf16>
    %cst_67 = arith.constant dense<0.000000e+00> : vector<24x32xf32>
    %111 = tpu.matmul %108, %110, %cst_67 {dimension_numbers = #tpu.dot_dimension_numbers<[1], [0], [0], [1], [0, 0, 1, 1], [], []>} : vector<24x32xbf16>, vector<32x32xbf16>, vector<24x32xf32> -> vector<24x32xf32>
    %c16 = arith.constant 16 : index
    %c0_68 = arith.constant 0 : index
    %112 = vector.load %arg5[%c16, %c0_68] : memref<20x32xf32, #tpu.memory_space<vmem>>, vector<1x32xf32>
    %113 = vector.broadcast %112 : vector<1x32xf32> to vector<24x32xf32>
    %114 = arith.addf %111, %113 : vector<24x32xf32>
    %cst_69 = arith.constant 0.000000e+00 : f32
    %115 = vector.broadcast %cst_69 : f32 to vector<24x32xf32>
    %116 = arith.maximumf %114, %115 : vector<24x32xf32>
    %117 = arith.truncf %116 : vector<24x32xf32> to vector<24x32xbf16>
    %c4_70 = arith.constant 4 : index
    %c0_71 = arith.constant 0 : index
    %c0_72 = arith.constant 0 : index
    %118 = vector.load %arg4[%c4_70, %c0_71, %c0_72] : memref<5x32x32xbf16, #tpu.memory_space<vmem>>, vector<1x32x32xbf16>
    %119 = vector.shape_cast %118 : vector<1x32x32xbf16> to vector<32x32xbf16>
    %cst_73 = arith.constant dense<0.000000e+00> : vector<24x32xf32>
    %120 = tpu.matmul %117, %119, %cst_73 {dimension_numbers = #tpu.dot_dimension_numbers<[1], [0], [0], [1], [0, 0, 1, 1], [], []>} : vector<24x32xbf16>, vector<32x32xbf16>, vector<24x32xf32> -> vector<24x32xf32>
    %c17 = arith.constant 17 : index
    %c0_74 = arith.constant 0 : index
    %121 = vector.load %arg5[%c17, %c0_74] : memref<20x32xf32, #tpu.memory_space<vmem>>, vector<1x32xf32>
    %122 = vector.broadcast %121 : vector<1x32xf32> to vector<24x32xf32>
    %123 = arith.addf %120, %122 : vector<24x32xf32>
    %cst_75 = arith.constant 0.000000e+00 : f32
    %124 = vector.broadcast %cst_75 : f32 to vector<24x32xf32>
    %125 = arith.maximumf %123, %124 : vector<24x32xf32>
    %c18 = arith.constant 18 : index
    %c0_76 = arith.constant 0 : index
    %126 = vector.load %arg5[%c18, %c0_76] : memref<20x32xf32, #tpu.memory_space<vmem>>, vector<1x32xf32>
    %127 = vector.broadcast %126 : vector<1x32xf32> to vector<24x32xf32>
    %128 = arith.mulf %125, %127 : vector<24x32xf32>
    %c19 = arith.constant 19 : index
    %c0_77 = arith.constant 0 : index
    %129 = vector.load %arg5[%c19, %c0_77] : memref<20x32xf32, #tpu.memory_space<vmem>>, vector<1x32xf32>
    %130 = vector.broadcast %129 : vector<1x32xf32> to vector<24x32xf32>
    %131 = arith.addf %128, %130 : vector<24x32xf32>
    %c0_78 = arith.constant 0 : index
    %c0_79 = arith.constant 0 : index
    %132 = vector.load %arg1[%c0_78, %c0_79] : memref<2x24xbf16, #tpu.memory_space<vmem>>, vector<2x24xbf16>
    %133 = arith.truncf %131 : vector<24x32xf32> to vector<24x32xbf16>
    %cst_80 = arith.constant dense<0.000000e+00> : vector<2x32xf32>
    %134 = tpu.matmul %132, %133, %cst_80 {dimension_numbers = #tpu.dot_dimension_numbers<[1], [0], [0], [1], [0, 0, 1, 1], [], []>} : vector<2x24xbf16>, vector<24x32xbf16>, vector<2x32xf32> -> vector<2x32xf32>
    %135 = arith.truncf %134 : vector<2x32xf32> to vector<2x32xbf16>
    %c0_81 = arith.constant 0 : index
    %c0_82 = arith.constant 0 : index
    %136 = vector.load %arg6[%c0_81, %c0_82] : memref<32x32xbf16, #tpu.memory_space<vmem>>, vector<32x32xbf16>
    %cst_83 = arith.constant dense<0.000000e+00> : vector<2x32xf32>
    %137 = tpu.matmul %135, %136, %cst_83 {dimension_numbers = #tpu.dot_dimension_numbers<[1], [0], [0], [1], [0, 0, 1, 1], [], []>} : vector<2x32xbf16>, vector<32x32xbf16>, vector<2x32xf32> -> vector<2x32xf32>
    %c0_84 = arith.constant 0 : index
    %c0_85 = arith.constant 0 : index
    %138 = vector.load %arg7[%c0_84, %c0_85] : memref<1x32xf32, #tpu.memory_space<vmem>>, vector<1x32xf32>
    %139 = vector.broadcast %138 : vector<1x32xf32> to vector<2x32xf32>
    %140 = arith.addf %137, %139 : vector<2x32xf32>
    %cst_86 = arith.constant 0.000000e+00 : f32
    %141 = vector.broadcast %cst_86 : f32 to vector<2x32xf32>
    %142 = arith.maximumf %140, %141 : vector<2x32xf32>
    %143 = arith.truncf %142 : vector<2x32xf32> to vector<2x32xbf16>
    %c0_87 = arith.constant 0 : index
    %c0_88 = arith.constant 0 : index
    %144 = vector.load %arg8[%c0_87, %c0_88] : memref<32x4xbf16, #tpu.memory_space<vmem>>, vector<32x4xbf16>
    %cst_89 = arith.constant dense<0.000000e+00> : vector<2x4xf32>
    %145 = tpu.matmul %143, %144, %cst_89 {dimension_numbers = #tpu.dot_dimension_numbers<[1], [0], [0], [1], [0, 0, 1, 1], [], []>} : vector<2x32xbf16>, vector<32x4xbf16>, vector<2x4xf32> -> vector<2x4xf32>
    %c0_90 = arith.constant 0 : index
    %c0_91 = arith.constant 0 : index
    %146 = vector.load %arg9[%c0_90, %c0_91] : memref<1x4xf32, #tpu.memory_space<vmem>>, vector<1x4xf32>
    %147 = vector.broadcast %146 : vector<1x4xf32> to vector<2x4xf32>
    %148 = arith.addf %145, %147 : vector<2x4xf32>
    %cst_92 = arith.constant dense<0xFF800000> : vector<2xf32>
    %149 = vector.multi_reduction <maximumf>, %148, %cst_92 [1] : vector<2x4xf32> to vector<2xf32>
    %150 = vector.shape_cast %149 : vector<2xf32> to vector<2x1xf32>
    %151 = vector.broadcast %150 : vector<2x1xf32> to vector<2x4xf32>
    %152 = arith.subf %148, %151 : vector<2x4xf32>
    %153 = math.exp %152 : vector<2x4xf32>
    %cst_93 = arith.constant dense<0.000000e+00> : vector<2xf32>
    %154 = vector.multi_reduction <add>, %153, %cst_93 [1] : vector<2x4xf32> to vector<2xf32>
    %155 = vector.shape_cast %154 : vector<2xf32> to vector<2x1xf32>
    %156 = math.log %155 : vector<2x1xf32>
    %157 = vector.broadcast %156 : vector<2x1xf32> to vector<2x4xf32>
    %158 = arith.subf %152, %157 : vector<2x4xf32>
    %c0_94 = arith.constant 0 : index
    %c0_95 = arith.constant 0 : index
    %159 = vector.load %arg10[%c0_94, %c0_95] : memref<2x4xf32, #tpu.memory_space<vmem>>, vector<2x4xf32>
    tpu.vector_store %arg10[%c0_94, %c0_95], %158 {strides = array<i32>} : memref<2x4xf32, #tpu.memory_space<vmem>>, vector<2x4xf32>,
    return
  }
}

</mosaic_0001>

<llo_original>
// kernel: gin_forward.1
$region0: #{gin_forward.1}
  #allocation0 [shape = 'u32[]', space=smem, size = 0x4, offset = 0x4, fixed_abs, tag = 'smem constant byte address 0x4 - core index']
  #allocation1 [shape = 'u32[72,128]{1,0:T(1,128)}', space=vmem, size = 0x9000, scoped, tag = 'internal scratch']
  %s0 = inlined_call_operand.hbm [shape: bf16[24,24], index: 0, kind: input, shape index: {}]
  %s1 = inlined_call_operand.vmem [shape: bf16[2,24], index: 1, kind: input, shape index: {}]
  %s2 = inlined_call_operand.hbm [shape: f32[24,32], index: 2, kind: input, shape index: {}]
  %s3 = inlined_call_operand.hbm [shape: bf16[5,32,32], index: 3, kind: input, shape index: {}]
  %s4 = inlined_call_operand.hbm [shape: bf16[5,32,32], index: 4, kind: input, shape index: {}]
  %s5 = inlined_call_operand.hbm [shape: f32[20,32], index: 5, kind: input, shape index: {}]
  %s6 = inlined_call_operand.vmem [shape: bf16[32,32], index: 6, kind: input, shape index: {}]
  %s7 = inlined_call_operand.vmem [shape: f32[1,32], index: 7, kind: input, shape index: {}]
  %s8 = inlined_call_operand.vmem [shape: bf16[32,4], index: 8, kind: input, shape index: {}]
  %s9 = inlined_call_operand.vmem [shape: f32[1,4], index: 9, kind: input, shape index: {}]
  %s10 = inlined_call_operand.hbm [shape: f32[2,4], index: 10, kind: output, shape index: {}]
  %s11 = sld [smem:[#allocation0]]
  $region70: #{gin_forward.1} parent=0
    _
  %s13 = ssub.s32 1, %s11
  %s14 = scalar_select 0, %s13, %s11
  $region1: #{gin_forward.1} parent=0
    #allocation2 [shape = 'u8[6144]{0}', space=vmem, size = 0x1800, scoped, tag = 'input window, operand 0, single buffered']
    #allocation3 [shape = 's32[1]{0}', space=sflag, size = 0x4, scoped, tag = 'scoped memory for gin_forward.1']
    #allocation4 [shape = 's32[1]{0}', space=sflag, size = 0x4, scoped, tag = 'scoped memory for gin_forward.1']
    #allocation5 [shape = 'u8[12288]{0}', space=vmem, size = 0x3000, scoped, tag = 'input window, operand 2, single buffered']
    #allocation6 [shape = 's32[1]{0}', space=sflag, size = 0x4, scoped, tag = 'scoped memory for gin_forward.1']
    #allocation7 [shape = 'u8[40960]{0}', space=vmem, size = 0xa000, scoped, tag = 'input window, operand 3, single buffered']
    #allocation8 [shape = 'u8[40960]{0}', space=vmem, size = 0xa000, scoped, tag = 'input window, operand 4, single buffered']
    #allocation9 [shape = 's32[1]{0}', space=sflag, size = 0x4, scoped, tag = 'scoped memory for gin_forward.1']
    #allocation10 [shape = 'u8[12288]{0}', space=vmem, size = 0x3000, scoped, tag = 'input window, operand 5, single buffered']
    #allocation11 [shape = 'u8[1024]{0}', space=vmem, size = 0x400, scoped, tag = 'output window, operand 0, single buffered']
    %15 = vsyncpa [#allocation3], 0
    %16 = vsyncpa [#allocation6], 0
    %17 = vsyncpa [#allocation9], 0
    %18 = vsyncpa [#allocation4], 0
    // Predicated region
    $region2: #{gin_forward.1} parent=1 // pred_check
      _
    $region3: #{gin_forward.1} parent=1 // pred_check_branch
      %20 = sbr.rel (0) target = $region5
    $region4: #{gin_forward.1} parent=1 // pred_region
      %22 = vsyncadd [#allocation3], 0
      %s23 = sshll.u32 %s0, 4
      %s24 = int_to_ptr.hbm [resolvable:$true] %s23
      %s25 = sshll.u32 [#allocation2], 4
      %s26 = int_to_ptr.vmem [resolvable:$true] %s25
      %31 = dma.hbm_to_vmem [thread:$0]  %s24, 192, %s26, [#allocation3], 64, 64, 4
    $region5: #{gin_forward.1} parent=1 // pred_fallthru
      _
    // Predicated region
    $region6: #{gin_forward.1} parent=1 // pred_check
      _
    $region7: #{gin_forward.1} parent=1 // pred_check_branch
      %33 = sbr.rel (0) target = $region9
    $region8: #{gin_forward.1} parent=1 // pred_region
      _
    $region9: #{gin_forward.1} parent=1 // pred_fallthru
      _
    // Predicated region
    $region10: #{gin_forward.1} parent=1 // pred_check
      _
    $region11: #{gin_forward.1} parent=1 // pred_check_branch
      %35 = sbr.rel (0) target = $region13
    $region12: #{gin_forward.1} parent=1 // pred_region
      %37 = vsyncadd [#allocation6], 0
      %s38 = sshll.u32 %s2, 4
      %s39 = int_to_ptr.hbm [resolvable:$true] %s38
      %s40 = sshll.u32 [#allocation5], 4
      %s41 = int_to_ptr.vmem [resolvable:$true] %s40
      %46 = dma.hbm_to_vmem [thread:$0]  %s39, 384, %s41, [#allocation6], 128, 128, 8
    $region13: #{gin_forward.1} parent=1 // pred_fallthru
      _
    // Predicated region
    $region14: #{gin_forward.1} parent=1 // pred_check
      _
    $region15: #{gin_forward.1} parent=1 // pred_check_branch
      %48 = sbr.rel (0) target = $region17
    $region16: #{gin_forward.1} parent=1 // pred_region
      %50 = vsyncadd [#allocation6], 0
      %s51 = sshll.u32 %s3, 4
      %s52 = int_to_ptr.hbm [resolvable:$true] %s51
      %s53 = sshll.u32 [#allocation7], 4
      %s54 = int_to_ptr.vmem [resolvable:$true] %s53
      %59 = dma.hbm_to_vmem [thread:$0]  %s52, 1280, %s54, [#allocation6], 64, 64, 4
    $region17: #{gin_forward.1} parent=1 // pred_fallthru
      _
    // Predicated region
    $region18: #{gin_forward.1} parent=1 // pred_check
      _
    $region19: #{gin_forward.1} parent=1 // pred_check_branch
      %61 = sbr.rel (0) target = $region21
    $region20: #{gin_forward.1} parent=1 // pred_region
      %63 = vsyncadd [#allocation9], 0
      %s64 = sshll.u32 %s4, 4
      %s65 = int_to_ptr.hbm [resolvable:$true] %s64
      %s66 = sshll.u32 [#allocation8], 4
      %s67 = int_to_ptr.vmem [resolvable:$true] %s66
      %72 = dma.hbm_to_vmem [thread:$0]  %s65, 1280, %s67, [#allocation9], 64, 64, 4
    $region21: #{gin_forward.1} parent=1 // pred_fallthru
      _
    // Predicated region
    $region22: #{gin_forward.1} parent=1 // pred_check
      _
    $region23: #{gin_forward.1} parent=1 // pred_check_branch
      %74 = sbr.rel (0) target = $region25
    $region24: #{gin_forward.1} parent=1 // pred_region
      %76 = vsyncadd [#allocation9], 0
      %s77 = sshll.u32 %s5, 4
      %s78 = int_to_ptr.hbm [resolvable:$true] %s77
      %s79 = sshll.u32 [#allocation10], 4
      %s80 = int_to_ptr.vmem [resolvable:$true] %s79
      %85 = dma.hbm_to_vmem [thread:$0]  %s78, 384, %s80, [#allocation9], 128, 128, 8
    $region25: #{gin_forward.1} parent=1 // pred_fallthru
      _
    // Predicated region
    $region26: #{gin_forward.1} parent=1 // pred_check
      _
    $region27: #{gin_forward.1} parent=1 // pred_check_branch
      %87 = sbr.rel (0) target = $region29
    $region28: #{gin_forward.1} parent=1 // pred_region
      _
    $region29: #{gin_forward.1} parent=1 // pred_fallthru
      _
    // Predicated region
    $region30: #{gin_forward.1} parent=1 // pred_check
      _
    $region31: #{gin_forward.1} parent=1 // pred_check_branch
      %89 = sbr.rel (0) target = $region33
    $region32: #{gin_forward.1} parent=1 // pred_region
      _
    $region33: #{gin_forward.1} parent=1 // pred_fallthru
      _
    // Predicated region
    $region34: #{gin_forward.1} parent=1 // pred_check
      _
    $region35: #{gin_forward.1} parent=1 // pred_check_branch
      %91 = sbr.rel (0) target = $region37
    $region36: #{gin_forward.1} parent=1 // pred_region
      _
    $region37: #{gin_forward.1} parent=1 // pred_fallthru
      _
    // Predicated region
    $region38: #{gin_forward.1} parent=1 // pred_check
      _
    $region39: #{gin_forward.1} parent=1 // pred_check_branch
      %93 = sbr.rel (0) target = $region41
    $region40: #{gin_forward.1} parent=1 // pred_region
      _
    $region41: #{gin_forward.1} parent=1 // pred_fallthru
      _
    // Predicated region
    $region42: #{gin_forward.1} parent=1 // pred_check
      _
    $region43: #{gin_forward.1} parent=1 // pred_check_branch
      %95 = sbr.rel (0) target = $region45
    $region44: #{gin_forward.1} parent=1 // pred_region
      %97 = dma.done [#allocation3], 192
    $region45: #{gin_forward.1} parent=1 // pred_fallthru
      _
    // Predicated region
    $region46: #{gin_forward.1} parent=1 // pred_check
      _
    $region47: #{gin_forward.1} parent=1 // pred_check_branch
      %99 = sbr.rel (0) target = $region49
    $region48: #{gin_forward.1} parent=1 // pred_region
      %101 = dma.done [#allocation6], 384
    $region49: #{gin_forward.1} parent=1 // pred_fallthru
      _
    // Predicated region
    $region50: #{gin_forward.1} parent=1 // pred_check
      _
    $region51: #{gin_forward.1} parent=1 // pred_check_branch
      %103 = sbr.rel (0) target = $region53
    $region52: #{gin_forward.1} parent=1 // pred_region
      %105 = dma.done [#allocation6], 1280
    $region53: #{gin_forward.1} parent=1 // pred_fallthru
      _
    // Predicated region
    $region54: #{gin_forward.1} parent=1 // pred_check
      _
    $region55: #{gin_forward.1} parent=1 // pred_check_branch
      %107 = sbr.rel (0) target = $region57
    $region56: #{gin_forward.1} parent=1 // pred_region
      %109 = dma.done [#allocation9], 1280
    $region57: #{gin_forward.1} parent=1 // pred_fallthru
      _
    // Predicated region
    $region58: #{gin_forward.1} parent=1 // pred_check
      _
    $region59: #{gin_forward.1} parent=1 // pred_check_branch
      %111 = sbr.rel (0) target = $region61
    $region60: #{gin_forward.1} parent=1 // pred_region
      %113 = dma.done [#allocation9], 384
    $region61: #{gin_forward.1} parent=1 // pred_fallthru
      _
    %v115 = vld [vmem:[#allocation2] sm:$0xf]
    %v116 = vld [vmem:[#allocation2 + $0x4] sm:$0xf]
    %v117 = vld [vmem:[#allocation2 + $0x8] sm:$0xf]
    %v118 = vld [vmem:[#allocation5] sm:$0xff]
    %v119 = vld [vmem:[#allocation5 + $0x8] sm:$0xff]
    %v120 = vld [vmem:[#allocation5 + $0x10] sm:$0xff]
    %v121 = vpack.c.bf16 %v119, %v118
    %v122 = vpack.c.bf16 %v120, %v120
    %v126 = vunpack.c.l.b16 %v115
    %v127 = vunpack.c.l.b16 %v116
    %v128 = vunpack.c.l.b16 %v117
    %v129 = vpack.c.b16 %v127, %v126
    %v130 = vpack.c.b16 %v128, %v128
    %vm131 = vcmask 195584
    %v133 = vsel %vm131, %v129, 0
    %v136 = vsel %vm131, %v130, 0
    %vm138 = vcmask 1043456
    %v140 = vsel %vm138, %v122, 0
    %142 = vmatpush.bf16.msra.mxu0 0
    %143 = vmatpush.bf16.msra.mxu0 0
    %144 = vmatpush.bf16.msra.mxu0 0
    %145 = vmatpush.bf16.msra.mxu0 0
    %146 = vmatpush.bf16.msra.mxu0 0
    %147 = vmatpush.bf16.msra.mxu0 0
    %148 = vmatpush.bf16.msra.mxu0 %v140
    %149 = vmatpush.bf16.msra.mxu0 %v121
    %150 = vmatmul.bf16.gmra.mxu0 %v133
    %v151 = vpop.f32.mrf.mxu0
    %v152 = vadd.f32 0.0, %v151
    %v153 = vpop.f32.mrf.mxu0
    %v154 = vadd.f32 0.0, %v153
    %155 = vmatmul.bf16.gmra.mxu0 %v136
    %v156 = vpop.f32.mrf.mxu0
    %v157 = vadd.f32 0.0, %v156
    %v158 = vpop.f32.mrf.mxu0
    %159 = vdwg.mxu0
    %v160 = vpack.c.bf16 %v154, %v152
    %v161 = vpack.c.bf16 %v157, %v157
    %v162 = vld [vmem:[#allocation7] sm:$0xf]
    %v163 = vld [vmem:[#allocation7 + $0x4] sm:$0xf]
    %v164 = vld [vmem:[#allocation7 + $0x8] sm:$0xf]
    %v165 = vld [vmem:[#allocation7 + $0xc] sm:$0xf]
    %v166 = vld [vmem:[#allocation10] sm:$0x1]
    %v167 = vperm.slane %v166, 0
    %v172 = vunpack.c.l.b16 %v162
    %v173 = vunpack.c.l.b16 %v163
    %v174 = vunpack.c.l.b16 %v164
    %v175 = vunpack.c.l.b16 %v165
    %v176 = vpack.c.b16 %v173, %v172
    %v177 = vpack.c.b16 %v175, %v174
    %vm180 = vcmask 261120
    %v182 = vsel %vm180, %v160, 0
    %v185 = vsel %vm180, %v161, 0
    %187 = vmatpush.bf16.msra.mxu0 0
    %188 = vmatpush.bf16.msra.mxu0 0
    %189 = vmatpush.bf16.msra.mxu0 0
    %190 = vmatpush.bf16.msra.mxu0 0
    %191 = vmatpush.bf16.msra.mxu0 0
    %192 = vmatpush.bf16.msra.mxu0 0
    %193 = vmatpush.bf16.msra.mxu0 %v177
    %194 = vmatpush.bf16.msra.mxu0 %v176
    %195 = vmatmul.bf16.gmra.mxu0 %v182
    %v196 = vpop.f32.mrf.mxu0
    %v197 = vadd.f32 %v167, %v196
    %v198 = vpop.f32.mrf.mxu0
    %v199 = vadd.f32 %v167, %v198
    %200 = vmatmul.bf16.gmra.mxu0 %v185
    %v201 = vpop.f32.mrf.mxu0
    %v202 = vadd.f32 %v167, %v201
    %v203 = vpop.f32.mrf.mxu0
    %204 = vdwg.mxu0
    %v205 = vmax.f32 %v197, 0.0
    %v206 = vmax.f32 %v199, 0.0
    %v207 = vmax.f32 %v202, 0.0
    %v208 = vpack.c.bf16 %v206, %v205
    %v209 = vpack.c.bf16 %v207, %v207
    %v210 = vld [vmem:[#allocation8] sm:$0xf]
    %v211 = vld [vmem:[#allocation8 + $0x4] sm:$0xf]
    %v212 = vld [vmem:[#allocation8 + $0x8] sm:$0xf]
    %v213 = vld [vmem:[#allocation8 + $0xc] sm:$0xf]
    %v214 = vld [vmem:[#allocation10 + $0x1] sm:$0x1]
    %v215 = vperm.slane %v214, 0
    %v220 = vunpack.c.l.b16 %v210
    %v221 = vunpack.c.l.b16 %v211
    %v222 = vunpack.c.l.b16 %v212
    %v223 = vunpack.c.l.b16 %v213
    %v224 = vpack.c.b16 %v221, %v220
    %v225 = vpack.c.b16 %v223, %v222
    %v229 = vsel %vm180, %v208, 0
    %v232 = vsel %vm180, %v209, 0
    %234 = vmatpush.bf16.msra.mxu0 0
    %235 = vmatpush.bf16.msra.mxu0 0
    %236 = vmatpush.bf16.msra.mxu0 0
    %237 = vmatpush.bf16.msra.mxu0 0
    %238 = vmatpush.bf16.msra.mxu0 0
    %239 = vmatpush.bf16.msra.mxu0 0
    %240 = vmatpush.bf16.msra.mxu0 %v225
    %241 = vmatpush.bf16.msra.mxu0 %v224
    %242 = vmatmul.bf16.gmra.mxu0 %v229
    %v243 = vpop.f32.mrf.mxu0
    %v244 = vadd.f32 %v215, %v243
    %v245 = vpop.f32.mrf.mxu0
    %v246 = vadd.f32 %v215, %v245
    %247 = vmatmul.bf16.gmra.mxu0 %v232
    %v248 = vpop.f32.mrf.mxu0
    %v249 = vadd.f32 %v215, %v248
    %v250 = vpop.f32.mrf.mxu0
    %251 = vdwg.mxu0
    %v252 = vmax.f32 %v244, 0.0
    %v253 = vmax.f32 %v246, 0.0
    %v254 = vmax.f32 %v249, 0.0
    %v255 = vld [vmem:[#allocation10 + $0x2] sm:$0x1]
    %v256 = vperm.slane %v255, 0
    %v257 = vmul.f32 %v252, %v256
    %v258 = vmul.f32 %v253, %v256
    %v259 = vmul.f32 %v254, %v256
    %v260 = vld [vmem:[#allocation10 + $0x3] sm:$0x1]
    %v261 = vperm.slane %v260, 0
    %v262 = vadd.f32 %v257, %v261
    %v263 = vadd.f32 %v258, %v261
    %v264 = vadd.f32 %v259, %v261
    %v265 = vpack.c.bf16 %v263, %v262
    %v266 = vpack.c.bf16 %v264, %v264
    %v268 = vsel %vm138, %v266, 0
    %270 = vmatpush.bf16.msra.mxu0 0
    %271 = vmatpush.bf16.msra.mxu0 0
    %272 = vmatpush.bf16.msra.mxu0 0
    %273 = vmatpush.bf16.msra.mxu0 0
    %274 = vmatpush.bf16.msra.mxu0 0
    %275 = vmatpush.bf16.msra.mxu0 0
    %276 = vmatpush.bf16.msra.mxu0 %v268
    %277 = vmatpush.bf16.msra.mxu0 %v265
    %278 = vmatmul.bf16.gmra.mxu0 %v133
    %v279 = vpop.f32.mrf.mxu0
    %v280 = vadd.f32 0.0, %v279
    %v281 = vpop.f32.mrf.mxu0
    %v282 = vadd.f32 0.0, %v281
    %283 = vmatmul.bf16.gmra.mxu0 %v136
    %v284 = vpop.f32.mrf.mxu0
    %v285 = vadd.f32 0.0, %v284
    %v286 = vpop.f32.mrf.mxu0
    %287 = vdwg.mxu0
    %v288 = vpack.c.bf16 %v282, %v280
    %v289 = vpack.c.bf16 %v285, %v285
    %s290 = scalar_lea.vmem [#allocation7], 16
    %v291 = vld [vmem:[%s290] sm:$0xf]
    %v292 = vld [vmem:[%s290 + $0x4] sm:$0xf]
    %v293 = vld [vmem:[%s290 + $0x8] sm:$0xf]
    %v294 = vld [vmem:[%s290 + $0xc] sm:$0xf]
    %v295 = vld [vmem:[#allocation10 + $0x4] sm:$0x1]
    %v296 = vperm.slane %v295, 0
    %v301 = vunpack.c.l.b16 %v291
    %v302 = vunpack.c.l.b16 %v292
    %v303 = vunpack.c.l.b16 %v293
    %v304 = vunpack.c.l.b16 %v294
    %v305 = vpack.c.b16 %v302, %v301
    %v306 = vpack.c.b16 %v304, %v303
    %v310 = vsel %vm180, %v288, 0
    %v313 = vsel %vm180, %v289, 0
    %315 = vmatpush.bf16.msra.mxu0 0
    %316 = vmatpush.bf16.msra.mxu0 0
    %317 = vmatpush.bf16.msra.mxu0 0
    %318 = vmatpush.bf16.msra.mxu0 0
    %319 = vmatpush.bf16.msra.mxu0 0
    %320 = vmatpush.bf16.msra.mxu0 0
    %321 = vmatpush.bf16.msra.mxu0 %v306
    %322 = vmatpush.bf16.msra.mxu0 %v305
    %323 = vmatmul.bf16.gmra.mxu0 %v310
    %v324 = vpop.f32.mrf.mxu0
    %v325 = vadd.f32 %v296, %v324
    %v326 = vpop.f32.mrf.mxu0
    %v327 = vadd.f32 %v296, %v326
    %328 = vmatmul.bf16.gmra.mxu0 %v313
    %v329 = vpop.f32.mrf.mxu0
    %v330 = vadd.f32 %v296, %v329
    %v331 = vpop.f32.mrf.mxu0
    %332 = vdwg.mxu0
    %v333 = vmax.f32 %v325, 0.0
    %v334 = vmax.f32 %v327, 0.0
    %v335 = vmax.f32 %v330, 0.0
    %v336 = vpack.c.bf16 %v334, %v333
    %v337 = vpack.c.bf16 %v335, %v335
    %s338 = scalar_lea.vmem [#allocation8], 16
    %v339 = vld [vmem:[%s338] sm:$0xf]
    %v340 = vld [vmem:[%s338 + $0x4] sm:$0xf]
    %v341 = vld [vmem:[%s338 + $0x8] sm:$0xf]
    %v342 = vld [vmem:[%s338 + $0xc] sm:$0xf]
    %v343 = vld [vmem:[#allocation10 + $0x5] sm:$0x1]
    %v344 = vperm.slane %v343, 0
    %v349 = vunpack.c.l.b16 %v339
    %v350 = vunpack.c.l.b16 %v340
    %v351 = vunpack.c.l.b16 %v341
    %v352 = vunpack.c.l.b16 %v342
    %v353 = vpack.c.b16 %v350, %v349
    %v354 = vpack.c.b16 %v352, %v351
    %v358 = vsel %vm180, %v336, 0
    %v361 = vsel %vm180, %v337, 0
    %363 = vmatpush.bf16.msra.mxu0 0
    %364 = vmatpush.bf16.msra.mxu0 0
    %365 = vmatpush.bf16.msra.mxu0 0
    %366 = vmatpush.bf16.msra.mxu0 0
    %367 = vmatpush.bf16.msra.mxu0 0
    %368 = vmatpush.bf16.msra.mxu0 0
    %369 = vmatpush.bf16.msra.mxu0 %v354
    %370 = vmatpush.bf16.msra.mxu0 %v353
    %371 = vmatmul.bf16.gmra.mxu0 %v358
    %v372 = vpop.f32.mrf.mxu0
    %v373 = vadd.f32 %v344, %v372
    %v374 = vpop.f32.mrf.mxu0
    %v375 = vadd.f32 %v344, %v374
    %376 = vmatmul.bf16.gmra.mxu0 %v361
    %v377 = vpop.f32.mrf.mxu0
    %v378 = vadd.f32 %v344, %v377
    %v379 = vpop.f32.mrf.mxu0
    %380 = vdwg.mxu0
    %v381 = vmax.f32 %v373, 0.0
    %v382 = vmax.f32 %v375, 0.0
    %v383 = vmax.f32 %v378, 0.0
    %v384 = vld [vmem:[#allocation10 + $0x6] sm:$0x1]
    %v385 = vperm.slane %v384, 0
    %v386 = vmul.f32 %v381, %v385
    %v387 = vmul.f32 %v382, %v385
    %v388 = vmul.f32 %v383, %v385
    %v389 = vld [vmem:[#allocation10 + $0x7] sm:$0x1]
    %v390 = vperm.slane %v389, 0
    %v391 = vadd.f32 %v386, %v390
    %v392 = vadd.f32 %v387, %v390
    %v393 = vadd.f32 %v388, %v390
    %v394 = vpack.c.bf16 %v392, %v391
    %v395 = vpack.c.bf16 %v393, %v393
    %v397 = vsel %vm138, %v395, 0
    %399 = vmatpush.bf16.msra.mxu0 0
    %400 = vmatpush.bf16.msra.mxu0 0
    %401 = vmatpush.bf16.msra.mxu0 0
    %402 = vmatpush.bf16.msra.mxu0 0
    %403 = vmatpush.bf16.msra.mxu0 0
    %404 = vmatpush.bf16.msra.mxu0 0
    %405 = vmatpush.bf16.msra.mxu0 %v397
    %406 = vmatpush.bf16.msra.mxu0 %v394
    %407 = vmatmul.bf16.gmra.mxu0 %v133
    %v408 = vpop.f32.mrf.mxu0
    %v409 = vadd.f32 0.0, %v408
    %v410 = vpop.f32.mrf.mxu0
    %v411 = vadd.f32 0.0, %v410
    %412 = vmatmul.bf16.gmra.mxu0 %v136
    %v413 = vpop.f32.mrf.mxu0
    %v414 = vadd.f32 0.0, %v413
    %v415 = vpop.f32.mrf.mxu0
    %416 = vdwg.mxu0
    %v417 = vpack.c.bf16 %v411, %v409
    %v418 = vpack.c.bf16 %v414, %v414
    %s419 = scalar_lea.vmem [#allocation7], 32
    %v420 = vld [vmem:[%s419] sm:$0xf]
    %v421 = vld [vmem:[%s419 + $0x4] sm:$0xf]
    %v422 = vld [vmem:[%s419 + $0x8] sm:$0xf]
    %v423 = vld [vmem:[%s419 + $0xc] sm:$0xf]
    %v424 = vld [vmem:[#allocation10 + $0x8] sm:$0x1]
    %v425 = vperm.slane %v424, 0
    %v430 = vunpack.c.l.b16 %v420
    %v431 = vunpack.c.l.b16 %v421
    %v432 = vunpack.c.l.b16 %v422
    %v433 = vunpack.c.l.b16 %v423
    %v434 = vpack.c.b16 %v431, %v430
    %v435 = vpack.c.b16 %v433, %v432
    %v439 = vsel %vm180, %v417, 0
    %v442 = vsel %vm180, %v418, 0
    %444 = vmatpush.bf16.msra.mxu0 0
    %445 = vmatpush.bf16.msra.mxu0 0
    %446 = vmatpush.bf16.msra.mxu0 0
    %447 = vmatpush.bf16.msra.mxu0 0
    %448 = vmatpush.bf16.msra.mxu0 0
    %449 = vmatpush.bf16.msra.mxu0 0
    %450 = vmatpush.bf16.msra.mxu0 %v435
    %451 = vmatpush.bf16.msra.mxu0 %v434
    %452 = vmatmul.bf16.gmra.mxu0 %v439
    %v453 = vpop.f32.mrf.mxu0
    %v454 = vadd.f32 %v425, %v453
    %v455 = vpop.f32.mrf.mxu0
    %v456 = vadd.f32 %v425, %v455
    %457 = vmatmul.bf16.gmra.mxu0 %v442
    %v458 = vpop.f32.mrf.mxu0
    %v459 = vadd.f32 %v425, %v458
    %v460 = vpop.f32.mrf.mxu0
    %461 = vdwg.mxu0
    %v462 = vmax.f32 %v454, 0.0
    %v463 = vmax.f32 %v456, 0.0
    %v464 = vmax.f32 %v459, 0.0
    %v465 = vpack.c.bf16 %v463, %v462
    %v466 = vpack.c.bf16 %v464, %v464
    %s467 = scalar_lea.vmem [#allocation8], 32
    %v468 = vld [vmem:[%s467] sm:$0xf]
    %v469 = vld [vmem:[%s467 + $0x4] sm:$0xf]
    %v470 = vld [vmem:[%s467 + $0x8] sm:$0xf]
    %v471 = vld [vmem:[%s467 + $0xc] sm:$0xf]
    %v472 = vld [vmem:[#allocation10 + $0x9] sm:$0x1]
    %v473 = vperm.slane %v472, 0
    %v478 = vunpack.c.l.b16 %v468
    %v479 = vunpack.c.l.b16 %v469
    %v480 = vunpack.c.l.b16 %v470
    %v481 = vunpack.c.l.b16 %v471
    %v482 = vpack.c.b16 %v479, %v478
    %v483 = vpack.c.b16 %v481, %v480
    %v487 = vsel %vm180, %v465, 0
    %v490 = vsel %vm180, %v466, 0
    %492 = vmatpush.bf16.msra.mxu0 0
    %493 = vmatpush.bf16.msra.mxu0 0
    %494 = vmatpush.bf16.msra.mxu0 0
    %495 = vmatpush.bf16.msra.mxu0 0
    %496 = vmatpush.bf16.msra.mxu0 0
    %497 = vmatpush.bf16.msra.mxu0 0
    %498 = vmatpush.bf16.msra.mxu0 %v483
    %499 = vmatpush.bf16.msra.mxu0 %v482
    %500 = vmatmul.bf16.gmra.mxu0 %v487
    %v501 = vpop.f32.mrf.mxu0
    %v502 = vadd.f32 %v473, %v501
    %v503 = vpop.f32.mrf.mxu0
    %v504 = vadd.f32 %v473, %v503
    %505 = vmatmul.bf16.gmra.mxu0 %v490
    %v506 = vpop.f32.mrf.mxu0
    %v507 = vadd.f32 %v473, %v506
    %v508 = vpop.f32.mrf.mxu0
    %509 = vdwg.mxu0
    %v510 = vmax.f32 %v502, 0.0
    %v511 = vmax.f32 %v504, 0.0
    %v512 = vmax.f32 %v507, 0.0
    %v513 = vld [vmem:[#allocation10 + $0xa] sm:$0x1]
    %v514 = vperm.slane %v513, 0
    %v515 = vmul.f32 %v510, %v514
    %v516 = vmul.f32 %v511, %v514
    %v517 = vmul.f32 %v512, %v514
    %v518 = vld [vmem:[#allocation10 + $0xb] sm:$0x1]
    %v519 = vperm.slane %v518, 0
    %v520 = vadd.f32 %v515, %v519
    %v521 = vadd.f32 %v516, %v519
    %v522 = vadd.f32 %v517, %v519
    %v523 = vpack.c.bf16 %v521, %v520
    %v524 = vpack.c.bf16 %v522, %v522
    %v526 = vsel %vm138, %v524, 0
    %528 = vmatpush.bf16.msra.mxu0 0
    %529 = vmatpush.bf16.msra.mxu0 0
    %530 = vmatpush.bf16.msra.mxu0 0
    %531 = vmatpush.bf16.msra.mxu0 0
    %532 = vmatpush.bf16.msra.mxu0 0
    %533 = vmatpush.bf16.msra.mxu0 0
    %534 = vmatpush.bf16.msra.mxu0 %v526
    %535 = vmatpush.bf16.msra.mxu0 %v523
    %536 = vmatmul.bf16.gmra.mxu0 %v133
    %v537 = vpop.f32.mrf.mxu0
    %v538 = vadd.f32 0.0, %v537
    %v539 = vpop.f32.mrf.mxu0
    %v540 = vadd.f32 0.0, %v539
    %541 = vmatmul.bf16.gmra.mxu0 %v136
    %v542 = vpop.f32.mrf.mxu0
    %v543 = vadd.f32 0.0, %v542
    %v544 = vpop.f32.mrf.mxu0
    %545 = vdwg.mxu0
    %v546 = vpack.c.bf16 %v540, %v538
    %v547 = vpack.c.bf16 %v543, %v543
    %s548 = scalar_lea.vmem [#allocation7], 48
    %v549 = vld [vmem:[%s548] sm:$0xf]
    %v550 = vld [vmem:[%s548 + $0x4] sm:$0xf]
    %v551 = vld [vmem:[%s548 + $0x8] sm:$0xf]
    %v552 = vld [vmem:[%s548 + $0xc] sm:$0xf]
    %v553 = vld [vmem:[#allocation10 + $0xc] sm:$0x1]
    %v554 = vperm.slane %v553, 0
    %v559 = vunpack.c.l.b16 %v549
    %v560 = vunpack.c.l.b16 %v550
    %v561 = vunpack.c.l.b16 %v551
    %v562 = vunpack.c.l.b16 %v552
    %v563 = vpack.c.b16 %v560, %v559
    %v564 = vpack.c.b16 %v562, %v561
    %v568 = vsel %vm180, %v546, 0
    %v571 = vsel %vm180, %v547, 0
    %573 = vmatpush.bf16.msra.mxu0 0
    %574 = vmatpush.bf16.msra.mxu0 0
    %575 = vmatpush.bf16.msra.mxu0 0
    %576 = vmatpush.bf16.msra.mxu0 0
    %577 = vmatpush.bf16.msra.mxu0 0
    %578 = vmatpush.bf16.msra.mxu0 0
    %579 = vmatpush.bf16.msra.mxu0 %v564
    %580 = vmatpush.bf16.msra.mxu0 %v563
    %581 = vmatmul.bf16.gmra.mxu0 %v568
    %v582 = vpop.f32.mrf.mxu0
    %v583 = vadd.f32 %v554, %v582
    %v584 = vpop.f32.mrf.mxu0
    %v585 = vadd.f32 %v554, %v584
    %586 = vmatmul.bf16.gmra.mxu0 %v571
    %v587 = vpop.f32.mrf.mxu0
    %v588 = vadd.f32 %v554, %v587
    %v589 = vpop.f32.mrf.mxu0
    %590 = vdwg.mxu0
    %v591 = vmax.f32 %v583, 0.0
    %v592 = vmax.f32 %v585, 0.0
    %v593 = vmax.f32 %v588, 0.0
    %v594 = vpack.c.bf16 %v592, %v591
    %v595 = vpack.c.bf16 %v593, %v593
    %s596 = scalar_lea.vmem [#allocation8], 48
    %v597 = vld [vmem:[%s596] sm:$0xf]
    %v598 = vld [vmem:[%s596 + $0x4] sm:$0xf]
    %v599 = vld [vmem:[%s596 + $0x8] sm:$0xf]
    %v600 = vld [vmem:[%s596 + $0xc] sm:$0xf]
    %v601 = vld [vmem:[#allocation10 + $0xd] sm:$0x1]
    %v602 = vperm.slane %v601, 0
    %v607 = vunpack.c.l.b16 %v597
    %v608 = vunpack.c.l.b16 %v598
    %v609 = vunpack.c.l.b16 %v599
    %v610 = vunpack.c.l.b16 %v600
    %v611 = vpack.c.b16 %v608, %v607
    %v612 = vpack.c.b16 %v610, %v609
    %v616 = vsel %vm180, %v594, 0
    %v619 = vsel %vm180, %v595, 0
    %621 = vmatpush.bf16.msra.mxu0 0
    %622 = vmatpush.bf16.msra.mxu0 0
    %623 = vmatpush.bf16.msra.mxu0 0
    %624 = vmatpush.bf16.msra.mxu0 0
    %625 = vmatpush.bf16.msra.mxu0 0
    %626 = vmatpush.bf16.msra.mxu0 0
    %627 = vmatpush.bf16.msra.mxu0 %v612
    %628 = vmatpush.bf16.msra.mxu0 %v611
    %629 = vmatmul.bf16.gmra.mxu0 %v616
    %v630 = vpop.f32.mrf.mxu0
    %v631 = vadd.f32 %v602, %v630
    %v632 = vpop.f32.mrf.mxu0
    %v633 = vadd.f32 %v602, %v632
    %634 = vmatmul.bf16.gmra.mxu0 %v619
    %v635 = vpop.f32.mrf.mxu0
    %v636 = vadd.f32 %v602, %v635
    %v637 = vpop.f32.mrf.mxu0
    %638 = vdwg.mxu0
    %v639 = vmax.f32 %v631, 0.0
    %v640 = vmax.f32 %v633, 0.0
    %v641 = vmax.f32 %v636, 0.0
    %v642 = vld [vmem:[#allocation10 + $0xe] sm:$0x1]
    %v643 = vperm.slane %v642, 0
    %v644 = vmul.f32 %v639, %v643
    %v645 = vmul.f32 %v640, %v643
    %v646 = vmul.f32 %v641, %v643
    %v647 = vld [vmem:[#allocation10 + $0xf] sm:$0x1]
    %v648 = vperm.slane %v647, 0
    %v649 = vadd.f32 %v644, %v648
    %v650 = vadd.f32 %v645, %v648
    %v651 = vadd.f32 %v646, %v648
    %v652 = vpack.c.bf16 %v650, %v649
    %v653 = vpack.c.bf16 %v651, %v651
    %v655 = vsel %vm138, %v653, 0
    %657 = vmatpush.bf16.msra.mxu0 0
    %658 = vmatpush.bf16.msra.mxu0 0
    %659 = vmatpush.bf16.msra.mxu0 0
    %660 = vmatpush.bf16.msra.mxu0 0
    %661 = vmatpush.bf16.msra.mxu0 0
    %662 = vmatpush.bf16.msra.mxu0 0
    %663 = vmatpush.bf16.msra.mxu0 %v655
    %664 = vmatpush.bf16.msra.mxu0 %v652
    %665 = vmatmul.bf16.gmra.mxu0 %v133
    %v666 = vpop.f32.mrf.mxu0
    %v667 = vadd.f32 0.0, %v666
    %v668 = vpop.f32.mrf.mxu0
    %v669 = vadd.f32 0.0, %v668
    %670 = vmatmul.bf16.gmra.mxu0 %v136
    %v671 = vpop.f32.mrf.mxu0
    %v672 = vadd.f32 0.0, %v671
    %v673 = vpop.f32.mrf.mxu0
    %674 = vdwg.mxu0
    %v675 = vpack.c.bf16 %v669, %v667
    %v676 = vpack.c.bf16 %v672, %v672
    %s677 = scalar_lea.vmem [#allocation7], 64
    %v678 = vld [vmem:[%s677] sm:$0xf]
    %v679 = vld [vmem:[%s677 + $0x4] sm:$0xf]
    %v680 = vld [vmem:[%s677 + $0x8] sm:$0xf]
    %v681 = vld [vmem:[%s677 + $0xc] sm:$0xf]
    %v682 = vld [vmem:[#allocation10 + $0x10] sm:$0x1]
    %v683 = vperm.slane %v682, 0
    %v688 = vunpack.c.l.b16 %v678
    %v689 = vunpack.c.l.b16 %v679
    %v690 = vunpack.c.l.b16 %v680
    %v691 = vunpack.c.l.b16 %v681
    %v692 = vpack.c.b16 %v689, %v688
    %v693 = vpack.c.b16 %v691, %v690
    %v697 = vsel %vm180, %v675, 0
    %v700 = vsel %vm180, %v676, 0
    %702 = vmatpush.bf16.msra.mxu0 0
    %703 = vmatpush.bf16.msra.mxu0 0
    %704 = vmatpush.bf16.msra.mxu0 0
    %705 = vmatpush.bf16.msra.mxu0 0
    %706 = vmatpush.bf16.msra.mxu0 0
    %707 = vmatpush.bf16.msra.mxu0 0
    %708 = vmatpush.bf16.msra.mxu0 %v693
    %709 = vmatpush.bf16.msra.mxu0 %v692
    %710 = vmatmul.bf16.gmra.mxu0 %v697
    %v711 = vpop.f32.mrf.mxu0
    %v712 = vadd.f32 %v683, %v711
    %v713 = vpop.f32.mrf.mxu0
    %v714 = vadd.f32 %v683, %v713
    %715 = vmatmul.bf16.gmra.mxu0 %v700
    %v716 = vpop.f32.mrf.mxu0
    %v717 = vadd.f32 %v683, %v716
    %v718 = vpop.f32.mrf.mxu0
    %719 = vdwg.mxu0
    %v720 = vmax.f32 %v712, 0.0
    %v721 = vmax.f32 %v714, 0.0
    %v722 = vmax.f32 %v717, 0.0
    %v723 = vpack.c.bf16 %v721, %v720
    %v724 = vpack.c.bf16 %v722, %v722
    %s725 = scalar_lea.vmem [#allocation8], 64
    %v726 = vld [vmem:[%s725] sm:$0xf]
    %v727 = vld [vmem:[%s725 + $0x4] sm:$0xf]
    %v728 = vld [vmem:[%s725 + $0x8] sm:$0xf]
    %v729 = vld [vmem:[%s725 + $0xc] sm:$0xf]
    %v730 = vld [vmem:[#allocation10 + $0x11] sm:$0x1]
    %v731 = vperm.slane %v730, 0
    %v736 = vunpack.c.l.b16 %v726
    %v737 = vunpack.c.l.b16 %v727
    %v738 = vunpack.c.l.b16 %v728
    %v739 = vunpack.c.l.b16 %v729
    %v740 = vpack.c.b16 %v737, %v736
    %v741 = vpack.c.b16 %v739, %v738
    %v745 = vsel %vm180, %v723, 0
    %v748 = vsel %vm180, %v724, 0
    %750 = vmatpush.bf16.msra.mxu0 0
    %751 = vmatpush.bf16.msra.mxu0 0
    %752 = vmatpush.bf16.msra.mxu0 0
    %753 = vmatpush.bf16.msra.mxu0 0
    %754 = vmatpush.bf16.msra.mxu0 0
    %755 = vmatpush.bf16.msra.mxu0 0
    %756 = vmatpush.bf16.msra.mxu0 %v741
    %757 = vmatpush.bf16.msra.mxu0 %v740
    %758 = vmatmul.bf16.gmra.mxu0 %v745
    %v759 = vpop.f32.mrf.mxu0
    %v760 = vadd.f32 %v731, %v759
    %v761 = vpop.f32.mrf.mxu0
    %v762 = vadd.f32 %v731, %v761
    %763 = vmatmul.bf16.gmra.mxu0 %v748
    %v764 = vpop.f32.mrf.mxu0
    %v765 = vadd.f32 %v731, %v764
    %v766 = vpop.f32.mrf.mxu0
    %767 = vdwg.mxu0
    %v768 = vmax.f32 %v760, 0.0
    %v769 = vmax.f32 %v762, 0.0
    %v770 = vmax.f32 %v765, 0.0
    %v771 = vld [vmem:[#allocation10 + $0x12] sm:$0x1]
    %v772 = vperm.slane %v771, 0
    %v773 = vmul.f32 %v768, %v772
    %v774 = vmul.f32 %v769, %v772
    %v775 = vmul.f32 %v770, %v772
    %v776 = vld [vmem:[#allocation10 + $0x13] sm:$0x1]
    %v777 = vperm.slane %v776, 0
    %v778 = vadd.f32 %v773, %v777
    %v779 = vadd.f32 %v774, %v777
    %v780 = vadd.f32 %v775, %v777
    %v781 = vld [vmem:[%s1] sm:$0x1]
    %v782 = vpack.c.bf16 %v779, %v778
    %v783 = vpack.c.bf16 %v780, %v780
    %v785 = vsel %vm131, %v781, 0
    %v788 = vsel %vm138, %v783, 0
    %790 = vmatpush.bf16.msra.mxu0 0
    %791 = vmatpush.bf16.msra.mxu0 0
    %792 = vmatpush.bf16.msra.mxu0 0
    %793 = vmatpush.bf16.msra.mxu0 0
    %794 = vmatpush.bf16.msra.mxu0 0
    %795 = vmatpush.bf16.msra.mxu0 0
    %796 = vmatpush.bf16.msra.mxu0 %v788
    %797 = vmatpush.bf16.msra.mxu0 %v782
    %798 = vmatmul.bf16.gmra.mxu0 %v785
    %v799 = vpop.f32.mrf.mxu0
    %v800 = vadd.f32 0.0, %v799
    %v801 = vpop.f32.mrf.mxu0
    %802 = vdwg.mxu0
    %v803 = vpack.c.bf16 %v800, %v800
    %v804 = vld [vmem:[%s6] sm:$0xf]
    %v805 = vld [vmem:[%s6 + $0x4] sm:$0xf]
    %v806 = vld [vmem:[%s6 + $0x8] sm:$0xf]
    %v807 = vld [vmem:[%s6 + $0xc] sm:$0xf]
    %v808 = vld [vmem:[%s7] sm:$0x1]
    %v810 = vperm.slane %v808, 0
    %v816 = vunpack.c.l.b16 %v804
    %v817 = vunpack.c.l.b16 %v805
    %v818 = vunpack.c.l.b16 %v806
    %v819 = vunpack.c.l.b16 %v807
    %v820 = vpack.c.b16 %v817, %v816
    %v821 = vpack.c.b16 %v819, %v818
    %v825 = vsel %vm180, %v803, 0
    %827 = vmatpush.bf16.msra.mxu0 0
    %828 = vmatpush.bf16.msra.mxu0 0
    %829 = vmatpush.bf16.msra.mxu0 0
    %830 = vmatpush.bf16.msra.mxu0 0
    %831 = vmatpush.bf16.msra.mxu0 0
    %832 = vmatpush.bf16.msra.mxu0 0
    %833 = vmatpush.bf16.msra.mxu0 %v821
    %834 = vmatpush.bf16.msra.mxu0 %v820
    %835 = vmatmul.bf16.gmra.mxu0 %v825
    %v836 = vpop.f32.mrf.mxu0
    %v837 = vadd.f32 %v810, %v836
    %v838 = vpop.f32.mrf.mxu0
    %839 = vdwg.mxu0
    %v840 = vmax.f32 %v837, 0.0
    %v841 = vpack.c.bf16 %v840, %v840
    %v842 = vld [vmem:[%s8] sm:$0xf]
    %v843 = vld [vmem:[%s8 + $0x4] sm:$0xf]
    %v844 = vld [vmem:[%s8 + $0x8] sm:$0xf]
    %v845 = vld [vmem:[%s8 + $0xc] sm:$0xf]
    %v846 = vld [vmem:[%s9] sm:$0x1]
    %v848 = vperm.slane %v846, 0
    %v854 = vunpack.c.l.b16 %v842
    %v855 = vunpack.c.l.b16 %v843
    %v856 = vunpack.c.l.b16 %v844
    %v857 = vunpack.c.l.b16 %v845
    %v858 = vpack.c.b16 %v855, %v854
    %v859 = vpack.c.b16 %v857, %v856
    %v863 = vsel %vm180, %v841, 0
    %865 = vmatpush.bf16.msra.mxu0 0
    %866 = vmatpush.bf16.msra.mxu0 0
    %867 = vmatpush.bf16.msra.mxu0 0
    %868 = vmatpush.bf16.msra.mxu0 0
    %869 = vmatpush.bf16.msra.mxu0 0
    %870 = vmatpush.bf16.msra.mxu0 0
    %871 = vmatpush.bf16.msra.mxu0 %v859
    %872 = vmatpush.bf16.msra.mxu0 %v858
    %873 = vmatmul.bf16.gmra.mxu0 %v863
    %v874 = vpop.f32.mrf.mxu0
    %v875 = vadd.f32 %v848, %v874
    %v876 = vpop.f32.mrf.mxu0
    %877 = vdwg.mxu0
    %vm878 = vcmask 25600
    %v879 = vsel %vm878, %v875, -inf
    %880 = vmax.xlane.f32.xlu0 %v879
    %v881 = vpop.xlane.xlu0 %880
    %v882 = vsub.f32 %v875, %v881
    %v883 = vmul.f32 %v882, 1.442695
    %v884 = vpow.pop %v883
    %v885 = vsel %vm878, %v884, 0.0
    %886 = vadd.xlane.f32.xlu0 %v885
    %v887 = vpop.xlane.xlu0 %886
    %v888 = vlog2.pop %v887
    %v889 = vmul.f32 %v888, 0.6931472
    %v890 = vsub.f32 %v882, %v889
    %891 = vst.msk [vmem:[#allocation11] sm:$0x3] %vm878, %v890
    // Predicated region
    $region62: #{gin_forward.1} parent=1 // pred_check
      _
    $region63: #{gin_forward.1} parent=1 // pred_check_branch
      %893 = sbr.rel (0) target = $region65
    $region64: #{gin_forward.1} parent=1 // pred_region
      %895 = vsyncadd [#allocation4], 0
      %s897 = sshll.u32 [#allocation11], 4
      %s898 = int_to_ptr.vmem [resolvable:$true] %s897
      %s899 = sshll.u32 %s10, 4
      %s900 = int_to_ptr.hbm [resolvable:$true] %s899
      %902 = dma.vmem_to_hbm [thread:$0]  %s898, 32, %s900, [#allocation4]
    $region65: #{gin_forward.1} parent=1 // pred_fallthru
      _
    // Predicated region
    $region66: #{gin_forward.1} parent=1 // pred_check
      _
    $region67: #{gin_forward.1} parent=1 // pred_check_branch
      %904 = sbr.rel (0) target = $region69
    $region68: #{gin_forward.1} parent=1 // pred_region
      %906 = dma.done [#allocation4], 32
    $region69: #{gin_forward.1} parent=1 // pred_fallthru
      _
    %907 = vsyncpa [#allocation3], 1
    %908 = vsyncpa [#allocation6], 1
    %909 = vsyncpa [#allocation9], 1
    %910 = vsyncpa [#allocation4], 1

</llo_original>
